<compile_context>
chip_gen: v5e
topology: v5e:2x2
jax: 0.10.0
libtpu: 0.0.40
codegen_flags: <defaults>
</compile_context>

<pallas_src>
import functools

import jax
import jax.numpy as jnp
from jax.experimental import pallas as pl
from jax.experimental.pallas import tpu as pltpu

# TODO(synk): self.gaussian_decays / blur_range are computed in __init__ but
# never used in forward(), so they are intentionally not part of the kernel.


def _ce_kernel(pred_ref, tgt_ref, out_ref, *, num_rows, last_weight,
               need_row_mask):
    """One grid step: (Nb, C) rows -> per-row weighted soft-label CE (Nb, 1)."""
    x = pred_ref[...].astype(jnp.float32)          # (Nb, C) logits
    t = tgt_ref[...].astype(jnp.float32)           # (Nb, C) soft targets
    nb, c = x.shape

    # ---- softmax(pred) over the class axis (the module's "pred_logit")
    m1 = jnp.max(x, axis=-1, keepdims=True)
    e1 = jnp.exp(x - m1)
    inv = pl.reciprocal(jnp.sum(e1, axis=-1, keepdims=True))   # (Nb, 1), EUP
    probs = e1 * inv                                           # in [0, 1]

    # ---- log_softmax(probs) (inside torch CrossEntropyLoss). probs <= 1, so
    #      no max subtraction is needed for stability; block covers exactly C
    #      classes, so no masking / padding correction is needed either.
    lse = jnp.log(jnp.sum(jnp.exp(probs), axis=-1, keepdims=True))  # (Nb, 1)
    logp = probs - lse

    # ---- weighted soft-target CE. Weights are all 1 except the last class
    #      (= last_weight); fold it as a rank-1 correction on that column.
    prod = t * logp                                            # (Nb, C)
    row_all = jnp.sum(prod, axis=-1, keepdims=True)            # (Nb, 1)
    per_row = -row_all + (1.0 - last_weight) * prod[:, c - 1:c]

    if need_row_mask:
        # Ragged last block: rows past num_rows hold garbage -> zero them out.
        row = pl.program_id(0) * nb + jax.lax.broadcasted_iota(
            jnp.int32, (nb, 1), 0)
        per_row = jnp.where(row < num_rows, per_row, 0.0)

    out_ref[...] = per_row


def cross_entropy_gaussian_smoothed2(pred, target, num_classes=722,
                                     block_rows=512):
    """pred: (B, T, C); target: (B, 1, T, C). Returns the scalar mean loss."""
    B, T, C = pred.shape
    assert C == num_classes
    assert target.shape == (B, 1, T, C)

    N = B * T
    pred2 = pred.reshape(N, C)      # contiguous reshapes: no extra HBM passes
    tgt2 = target.reshape(N, C)

    if N <= block_rows:             # small problems: one block, no masking
        nb, grid = N, 1
    else:
        nb, grid = block_rows, pl.cdiv(N, block_rows)
    np_rows = nb * grid
    need_row_mask = np_rows != N

    kernel = functools.partial(
        _ce_kernel, num_rows=N, last_weight=1.0 / 50.0,
        need_row_mask=need_row_mask)

    per_row = pl.pallas_call(
        kernel,
        out_shape=jax.ShapeDtypeStruct((np_rows, 1), jnp.float32),
        grid_spec=pltpu.PrefetchScalarGridSpec(
            num_scalar_prefetch=0,
            grid=(grid,),
            in_specs=[
                pl.BlockSpec((nb, C), lambda i: (i, 0)),
                pl.BlockSpec((nb, C), lambda i: (i, 0)),
            ],
            out_specs=pl.BlockSpec((nb, 1), lambda i: (i, 0)),
        ),
        compiler_params=pltpu.CompilerParams(
            dimension_semantics=("parallel",),
            vmem_limit_bytes=32 * 1024 * 1024,  # headroom for 512-row tiles,
                                                # still <= physical on v7x
        ),
    )(pred2, tgt2)

    return jnp.sum(per_row) / jnp.float32(N)


def _reference(pred, target, num_classes=722):
    """Pure-JAX reference matching torch.nn.CrossEntropyLoss(weight=reweight)
    with probabilistic targets and reduction='mean'."""
    B, T, C = pred.shape
    weight = jnp.ones((C,), jnp.float32).at[C - 1].set(1.0 / 50.0)
    p = jax.nn.softmax(pred.astype(jnp.float32), axis=-1).reshape(-1, C)
    y = target.astype(jnp.float32).reshape(-1, C)
    logp = jax.nn.log_softmax(p, axis=-1)
    per_row = -jnp.sum(weight[None, :] * y * logp, axis=-1)
    return jnp.mean(per_row)


if __name__ == "__main__":
    NUM_CLASSES = 722   # module default

    # ---- small case (single block, no row masking) ----
    B, T = 2, 8
    key = jax.random.PRNGKey(0)
    k1, k2, k3, k4 = jax.random.split(key, 4)
    pred = jax.random.normal(k1, (B, T, NUM_CLASSES), jnp.float32)
    target = jax.nn.softmax(
        jax.random.normal(k2, (B, 1, T, NUM_CLASSES), jnp.float32), axis=-1)

    loss = cross_entropy_gaussian_smoothed2(pred, target,
                                            num_classes=NUM_CLASSES)
    loss = jax.block_until_ready(loss)
    ref = jax.block_until_ready(_reference(pred, target,
                                           num_classes=NUM_CLASSES))
    assert jnp.allclose(loss, ref, rtol=1e-5, atol=1e-5), (loss, ref)

    # ---- larger ragged case (multi-block grid + masked last block) ----
    B2, T2 = 2, 300   # N = 600 -> two 512-row blocks, last block ragged
    pred2 = jax.random.normal(k3, (B2, T2, NUM_CLASSES), jnp.float32)
    target2 = jax.nn.softmax(
        jax.random.normal(k4, (B2, 1, T2, NUM_CLASSES), jnp.float32), axis=-1)

    loss2 = cross_entropy_gaussian_smoothed2(pred2, target2,
                                             num_classes=NUM_CLASSES)
    loss2 = jax.block_until_ready(loss2)
    ref2 = jax.block_until_ready(_reference(pred2, target2,
                                            num_classes=NUM_CLASSES))
    assert jnp.allclose(loss2, ref2, rtol=1e-5, atol=1e-5), (loss2, ref2)

    print("KERNEL_OK")
</pallas_src>

<mosaic_0001>
module attributes {stable_mosaic.version = 11 : i64} {
  func.func @_ce_kernel(%arg0: i32, %arg1: memref<16x722xf32, #tpu.memory_space<vmem>>, %arg2: memref<16x722xf32, #tpu.memory_space<vmem>>, %arg3: memref<16x1xf32, #tpu.memory_space<vmem>>) attributes {dimension_semantics = [#tpu.dimension_semantics<parallel>], iteration_bounds = array<i64: 1>, scalar_prefetch = 0 : i64, scratch_operands = 0 : i64, tpu.core_type = #tpu.core_type<tc>, window_params = [{transform_indices = @transform_0, window_bounds = array<i64: 16, 722>}, {transform_indices = @transform_1, window_bounds = array<i64: 16, 722>}, {transform_indices = @transform_2, window_bounds = array<i64: 16, 1>}]} {
    %c0 = arith.constant 0 : index
    %c0_0 = arith.constant 0 : index
    %0 = vector.load %arg1[%c0, %c0_0] : memref<16x722xf32, #tpu.memory_space<vmem>>, vector<16x722xf32>
    %c0_1 = arith.constant 0 : index
    %c0_2 = arith.constant 0 : index
    %1 = vector.load %arg2[%c0_1, %c0_2] : memref<16x722xf32, #tpu.memory_space<vmem>>, vector<16x722xf32>
    %cst = arith.constant dense<0xFF800000> : vector<16xf32>
    %2 = vector.multi_reduction <maximumf>, %0, %cst [1] : vector<16x722xf32> to vector<16xf32>
    %3 = vector.shape_cast %2 : vector<16xf32> to vector<16x1xf32>
    %4 = vector.broadcast %3 : vector<16x1xf32> to vector<16x722xf32>
    %5 = arith.subf %0, %4 : vector<16x722xf32>
    %6 = math.exp %5 : vector<16x722xf32>
    %cst_3 = arith.constant dense<0.000000e+00> : vector<16xf32>
    %7 = vector.multi_reduction <add>, %6, %cst_3 [1] : vector<16x722xf32> to vector<16xf32>
    %8 = vector.shape_cast %7 : vector<16xf32> to vector<16x1xf32>
    %9 = tpu.reciprocal %8 : vector<16x1xf32> -> vector<16x1xf32>
    %10 = vector.broadcast %9 : vector<16x1xf32> to vector<16x722xf32>
    %11 = arith.mulf %6, %10 : vector<16x722xf32>
    %12 = math.exp %11 : vector<16x722xf32>
    %cst_4 = arith.constant dense<0.000000e+00> : vector<16xf32>
    %13 = vector.multi_reduction <add>, %12, %cst_4 [1] : vector<16x722xf32> to vector<16xf32>
    %14 = vector.shape_cast %13 : vector<16xf32> to vector<16x1xf32>
    %15 = math.log %14 : vector<16x1xf32>
    %16 = vector.broadcast %15 : vector<16x1xf32> to vector<16x722xf32>
    %17 = arith.subf %11, %16 : vector<16x722xf32>
    %18 = arith.mulf %1, %17 : vector<16x722xf32>
    %cst_5 = arith.constant dense<0.000000e+00> : vector<16xf32>
    %19 = vector.multi_reduction <add>, %18, %cst_5 [1] : vector<16x722xf32> to vector<16xf32>
    %20 = vector.shape_cast %19 : vector<16xf32> to vector<16x1xf32>
    %cst_6 = arith.constant 0.000000e+00 : f32
    %21 = vector.broadcast %cst_6 : f32 to vector<16x1xf32>
    %22 = arith.subf %21, %20 : vector<16x1xf32>
    %23 = vector.extract_strided_slice %18 {offsets = [0, 721], sizes = [16, 1], strides = [1, 1]} : vector<16x722xf32> to vector<16x1xf32>
    %cst_7 = arith.constant 9.800000e-01 : f32
    %24 = vector.broadcast %cst_7 : f32 to vector<16x1xf32>
    %25 = arith.mulf %24, %23 : vector<16x1xf32>
    %26 = arith.addf %22, %25 : vector<16x1xf32>
    %c0_8 = arith.constant 0 : index
    %c0_9 = arith.constant 0 : index
    %27 = vector.load %arg3[%c0_8, %c0_9] : memref<16x1xf32, #tpu.memory_space<vmem>>, vector<16x1xf32>
    tpu.vector_store %arg3[%c0_8, %c0_9], %26 {strides = array<i32>} : memref<16x1xf32, #tpu.memory_space<vmem>>, vector<16x1xf32>,
    return
  }
  func.func @transform_0(%arg0: i32) -> (i32, i32) {
    %c0_i32 = arith.constant 0 : i32
    %c0_i32_0 = arith.constant 0 : i32
    return %arg0, %c0_i32 : i32, i32
  }
  func.func @transform_1(%arg0: i32) -> (i32, i32) {
    %c0_i32 = arith.constant 0 : i32
    %c0_i32_0 = arith.constant 0 : i32
    return %arg0, %c0_i32 : i32, i32
  }
  func.func @transform_2(%arg0: i32) -> (i32, i32) {
    %c0_i32 = arith.constant 0 : i32
    %c0_i32_0 = arith.constant 0 : i32
    return %arg0, %c0_i32 : i32, i32
  }
}

</mosaic_0001>

<llo_original>
// kernel: tpu_custom_call.1
$region0: #{tpu_custom_call.1}
  #allocation0 [shape = 'u32[]', space=smem, size = 0x4, offset = 0x4, fixed_abs, tag = 'smem constant byte address 0x4 - core index']
  #allocation1 [shape = 'u32[72,128]{1,0:T(1,128)}', space=vmem, size = 0x9000, scoped, tag = 'internal scratch']
  %s0 = inlined_call_operand.hbm [shape: f32[16,722], index: 0, kind: input, shape index: {}]
  %s1 = inlined_call_operand.hbm [shape: f32[16,722], index: 1, kind: input, shape index: {}]
  %s2 = inlined_call_operand.vmem [shape: f32[16,1], index: 2, kind: output, shape index: {}]
  %s3 = sld [smem:[#allocation0]]
  $region26: #{tpu_custom_call.1} parent=0
    _
  %s5 = ssub.s32 1, %s3
  %s6 = scalar_select 0, %s5, %s3
  $region1: #{tpu_custom_call.1} parent=0
    #allocation2 [shape = 'u8[49152]{0}', space=vmem, size = 0xc000, scoped, tag = 'input window, operand 0, single buffered']
    #allocation3 [shape = 's32[1]{0}', space=sflag, size = 0x4, scoped, tag = 'scoped memory for tpu_custom_call.1']
    #allocation4 [shape = 'u8[49152]{0}', space=vmem, size = 0xc000, scoped, tag = 'input window, operand 1, single buffered']
    #allocation5 [shape = 's32[1]{0}', space=sflag, size = 0x4, scoped, tag = 'scoped memory for tpu_custom_call.1']
    %7 = vsyncpa [#allocation3], 0
    %8 = vsyncpa [#allocation5], 0
    // Predicated region
    $region2: #{tpu_custom_call.1} parent=1 // pred_check
      _
    $region3: #{tpu_custom_call.1} parent=1 // pred_check_branch
      %10 = sbr.rel (0) target = $region5
    $region4: #{tpu_custom_call.1} parent=1 // pred_region
      %12 = vsyncadd [#allocation3], 0
      %s13 = sshll.u32 %s0, 4
      %s14 = int_to_ptr.hbm [resolvable:$true] %s13
      %s15 = sshll.u32 [#allocation2], 4
      %s16 = int_to_ptr.vmem [resolvable:$true] %s15
      %21 = dma.hbm_to_vmem [thread:$0]  %s14, 1536, %s16, [#allocation3], 768, 768, 48
    $region5: #{tpu_custom_call.1} parent=1 // pred_fallthru
      _
    // Predicated region
    $region6: #{tpu_custom_call.1} parent=1 // pred_check
      _
    $region7: #{tpu_custom_call.1} parent=1 // pred_check_branch
      %23 = sbr.rel (0) target = $region9
    $region8: #{tpu_custom_call.1} parent=1 // pred_region
      %25 = vsyncadd [#allocation5], 0
      %s26 = sshll.u32 %s1, 4
      %s27 = int_to_ptr.hbm [resolvable:$true] %s26
      %s28 = sshll.u32 [#allocation4], 4
      %s29 = int_to_ptr.vmem [resolvable:$true] %s28
      %34 = dma.hbm_to_vmem [thread:$0]  %s27, 1536, %s29, [#allocation5], 768, 768, 48
    $region9: #{tpu_custom_call.1} parent=1 // pred_fallthru
      _
    // Predicated region
    $region10: #{tpu_custom_call.1} parent=1 // pred_check
      _
    $region11: #{tpu_custom_call.1} parent=1 // pred_check_branch
      %36 = sbr.rel (0) target = $region13
    $region12: #{tpu_custom_call.1} parent=1 // pred_region
      %38 = dma.done [#allocation3], 1536
    $region13: #{tpu_custom_call.1} parent=1 // pred_fallthru
      _
    // Predicated region
    $region14: #{tpu_custom_call.1} parent=1 // pred_check
      _
    $region15: #{tpu_custom_call.1} parent=1 // pred_check_branch
      %40 = sbr.rel (0) target = $region17
    $region16: #{tpu_custom_call.1} parent=1 // pred_region
      %42 = dma.done [#allocation5], 1536
    $region17: #{tpu_custom_call.1} parent=1 // pred_fallthru
      _
    %v43 = vld [vmem:[#allocation2] sm:$0xff]
    %v44 = vld [vmem:[#allocation2 + $0x8] sm:$0xff]
    %v45 = vld [vmem:[#allocation2 + $0x10] sm:$0xff]
    %v46 = vld [vmem:[#allocation2 + $0x18] sm:$0xff]
    %v47 = vld [vmem:[#allocation2 + $0x20] sm:$0xff]
    %v48 = vld [vmem:[#allocation2 + $0x28] sm:$0xff]
    %v49 = vld [vmem:[#allocation2 + $0x30] sm:$0xff]
    %v50 = vld [vmem:[#allocation2 + $0x38] sm:$0xff]
    %v51 = vld [vmem:[#allocation2 + $0x40] sm:$0xff]
    %v52 = vld [vmem:[#allocation2 + $0x48] sm:$0xff]
    %v53 = vld [vmem:[#allocation2 + $0x50] sm:$0xff]
    %v54 = vld [vmem:[#allocation2 + $0x58] sm:$0xff]
    %v55 = vld [vmem:[#allocation4] sm:$0xff]
    %v56 = vld [vmem:[#allocation4 + $0x8] sm:$0xff]
    %v57 = vld [vmem:[#allocation4 + $0x10] sm:$0xff]
    %v58 = vld [vmem:[#allocation4 + $0x18] sm:$0xff]
    %v59 = vld [vmem:[#allocation4 + $0x20] sm:$0xff]
    %v60 = vld [vmem:[#allocation4 + $0x28] sm:$0xff]
    %v61 = vld [vmem:[#allocation4 + $0x30] sm:$0xff]
    %v62 = vld [vmem:[#allocation4 + $0x38] sm:$0xff]
    %v63 = vld [vmem:[#allocation4 + $0x40] sm:$0xff]
    %v64 = vld [vmem:[#allocation4 + $0x48] sm:$0xff]
    %v65 = vld [vmem:[#allocation4 + $0x50] sm:$0xff]
    %v66 = vld [vmem:[#allocation4 + $0x58] sm:$0xff]
    %v67 = vmax.f32 %v43, %v45
    %v68 = vmax.f32 %v44, %v46
    %v69 = vmax.f32 %v67, %v47
    %vm70 = vcmask 670720
    %v71 = vsel %vm70, %v48, -inf
    %v72 = vmax.f32 %v68, %v71
    %v73 = vmax.f32 %v69, %v72
    %74 = vmax.xlane.f32.xlu0 %v73
    %v75 = vpop.xlane.xlu0 %74
    %v76 = vmax.f32 %v49, %v51
    %v77 = vmax.f32 %v50, %v52
    %v78 = vmax.f32 %v76, %v53
    %v79 = vsel %vm70, %v54, -inf
    %v80 = vmax.f32 %v77, %v79
    %v81 = vmax.f32 %v78, %v80
    %82 = vmax.xlane.f32.xlu0 %v81
    %v83 = vpop.xlane.xlu0 %82
    %v84 = vsub.f32 %v43, %v75
    %v85 = vsub.f32 %v44, %v75
    %v86 = vsub.f32 %v45, %v75
    %v87 = vsub.f32 %v46, %v75
    %v88 = vsub.f32 %v47, %v75
    %v89 = vsub.f32 %v48, %v75
    %v90 = vsub.f32 %v49, %v83
    %v91 = vsub.f32 %v50, %v83
    %v92 = vsub.f32 %v51, %v83
    %v93 = vsub.f32 %v52, %v83
    %v94 = vsub.f32 %v53, %v83
    %v95 = vsub.f32 %v54, %v83
    %v96 = vmul.f32 %v84, 1.442695
    %v97 = vpow.pop %v96
    %v98 = vmul.f32 %v85, 1.442695
    %v99 = vpow.pop %v98
    %v100 = vmul.f32 %v86, 1.442695
    %v101 = vpow.pop %v100
    %v102 = vmul.f32 %v87, 1.442695
    %v103 = vpow.pop %v102
    %v104 = vmul.f32 %v88, 1.442695
    %v105 = vpow.pop %v104
    %v106 = vmul.f32 %v89, 1.442695
    %v107 = vpow.pop %v106
    %v108 = vmul.f32 %v90, 1.442695
    %v109 = vpow.pop %v108
    %v110 = vmul.f32 %v91, 1.442695
    %v111 = vpow.pop %v110
    %v112 = vmul.f32 %v92, 1.442695
    %v113 = vpow.pop %v112
    %v114 = vmul.f32 %v93, 1.442695
    %v115 = vpow.pop %v114
    %v116 = vmul.f32 %v94, 1.442695
    %v117 = vpow.pop %v116
    %v118 = vmul.f32 %v95, 1.442695
    %v119 = vpow.pop %v118
    %v120 = vadd.f32 %v97, %v99
    %v121 = vadd.f32 %v120, %v101
    %v122 = vadd.f32 %v121, %v103
    %v123 = vadd.f32 %v122, %v105
    %v124 = vsel %vm70, %v107, 0.0
    %v125 = vadd.f32 %v123, %v124
    %126 = vadd.xlane.f32.xlu0 %v125
    %v127 = vpop.xlane.xlu0 %126
    %v128 = vadd.f32 %v109, %v111
    %v129 = vadd.f32 %v128, %v113
    %v130 = vadd.f32 %v129, %v115
    %v131 = vadd.f32 %v130, %v117
    %v132 = vsel %vm70, %v119, 0.0
    %v133 = vadd.f32 %v131, %v132
    %134 = vadd.xlane.f32.xlu0 %v133
    %v135 = vpop.xlane.xlu0 %134
    %v136 = vrcp.pop %v127
    %v137 = vmul.f32 %v127, %v136
    %v138 = vsub.f32 1.0, %v137
    %v139 = vmul.f32 %v136, %v138
    %v140 = vadd.f32 %v136, %v139
    %vm141 = vweird.f32 %v127
    %vm142 = vweird.f32 %v136
    %vm143 = vmor %vm141, %vm142
    %v144 = vsel %vm143, %v136, %v140
    %v145 = vand.u32 2147483647, %v127
    %vm146 = vcmp.eq.f32.partialorder %v145, 8.507059e+37
    %v147 = vand.u32 %v127, 2147483648
    %v148 = vor.u32 1.1754944e-38, %v147
    %v149 = vsel %vm146, %v148, %v144
    %v150 = vrcp.pop %v135
    %v151 = vmul.f32 %v135, %v150
    %v152 = vsub.f32 1.0, %v151
    %v153 = vmul.f32 %v150, %v152
    %v154 = vadd.f32 %v150, %v153
    %vm155 = vweird.f32 %v135
    %vm156 = vweird.f32 %v150
    %vm157 = vmor %vm155, %vm156
    %v158 = vsel %vm157, %v150, %v154
    %v159 = vand.u32 2147483647, %v135
    %vm160 = vcmp.eq.f32.partialorder %v159, 8.507059e+37
    %v161 = vand.u32 %v135, 2147483648
    %v162 = vor.u32 1.1754944e-38, %v161
    %v163 = vsel %vm160, %v162, %v158
    %v164 = vmul.f32 %v97, %v149
    %v165 = vmul.f32 %v99, %v149
    %v166 = vmul.f32 %v101, %v149
    %v167 = vmul.f32 %v103, %v149
    %v168 = vmul.f32 %v105, %v149
    %v169 = vmul.f32 %v107, %v149
    %v170 = vmul.f32 %v109, %v163
    %v171 = vmul.f32 %v111, %v163
    %v172 = vmul.f32 %v113, %v163
    %v173 = vmul.f32 %v115, %v163
    %v174 = vmul.f32 %v117, %v163
    %v175 = vmul.f32 %v119, %v163
    %v176 = vmul.f32 %v164, 1.442695
    %v177 = vpow.pop %v176
    %v178 = vmul.f32 %v165, 1.442695
    %v179 = vpow.pop %v178
    %v180 = vmul.f32 %v166, 1.442695
    %v181 = vpow.pop %v180
    %v182 = vmul.f32 %v167, 1.442695
    %v183 = vpow.pop %v182
    %v184 = vmul.f32 %v168, 1.442695
    %v185 = vpow.pop %v184
    %v186 = vmul.f32 %v169, 1.442695
    %v187 = vpow.pop %v186
    %v188 = vmul.f32 %v170, 1.442695
    %v189 = vpow.pop %v188
    %v190 = vmul.f32 %v171, 1.442695
    %v191 = vpow.pop %v190
    %v192 = vmul.f32 %v172, 1.442695
    %v193 = vpow.pop %v192
    %v194 = vmul.f32 %v173, 1.442695
    %v195 = vpow.pop %v194
    %v196 = vmul.f32 %v174, 1.442695
    %v197 = vpow.pop %v196
    %v198 = vmul.f32 %v175, 1.442695
    %v199 = vpow.pop %v198
    %v200 = vadd.f32 %v177, %v179
    %v201 = vadd.f32 %v200, %v181
    %v202 = vadd.f32 %v201, %v183
    %v203 = vadd.f32 %v202, %v185
    %v204 = vsel %vm70, %v187, 0.0
    %v205 = vadd.f32 %v203, %v204
    %206 = vadd.xlane.f32.xlu0 %v205
    %v207 = vpop.xlane.xlu0 %206
    %v208 = vadd.f32 %v189, %v191
    %v209 = vadd.f32 %v208, %v193
    %v210 = vadd.f32 %v209, %v195
    %v211 = vadd.f32 %v210, %v197
    %v212 = vsel %vm70, %v199, 0.0
    %v213 = vadd.f32 %v211, %v212
    %214 = vadd.xlane.f32.xlu0 %v213
    %v215 = vpop.xlane.xlu0 %214
    %v216 = vlog2.pop %v207
    %v217 = vmul.f32 %v216, 0.6931472
    %v218 = vlog2.pop %v215
    %v219 = vmul.f32 %v218, 0.6931472
    %v220 = vsub.f32 %v164, %v217
    %v221 = vsub.f32 %v165, %v217
    %v222 = vsub.f32 %v166, %v217
    %v223 = vsub.f32 %v167, %v217
    %v224 = vsub.f32 %v168, %v217
    %v225 = vsub.f32 %v169, %v217
    %v226 = vsub.f32 %v170, %v219
    %v227 = vsub.f32 %v171, %v219
    %v228 = vsub.f32 %v172, %v219
    %v229 = vsub.f32 %v173, %v219
    %v230 = vsub.f32 %v174, %v219
    %v231 = vsub.f32 %v175, %v219
    %v232 = vmul.f32 %v55, %v220
    %v233 = vmul.f32 %v56, %v221
    %v234 = vmul.f32 %v57, %v222
    %v235 = vmul.f32 %v58, %v223
    %v236 = vmul.f32 %v59, %v224
    %v237 = vmul.f32 %v60, %v225
    %v238 = vmul.f32 %v61, %v226
    %v239 = vmul.f32 %v62, %v227
    %v240 = vmul.f32 %v63, %v228
    %v241 = vmul.f32 %v64, %v229
    %v242 = vmul.f32 %v65, %v230
    %v243 = vmul.f32 %v66, %v231
    %v244 = vadd.f32 %v232, %v233
    %v245 = vadd.f32 %v244, %v234
    %v246 = vadd.f32 %v245, %v235
    %v247 = vadd.f32 %v246, %v236
    %v248 = vsel %vm70, %v237, 0.0
    %v249 = vadd.f32 %v247, %v248
    %250 = vadd.xlane.f32.xlu0 %v249
    %v251 = vpop.xlane.xlu0 %250
    %v252 = vadd.f32 %v238, %v239
    %v253 = vadd.f32 %v252, %v240
    %v254 = vadd.f32 %v253, %v241
    %v255 = vadd.f32 %v254, %v242
    %v256 = vsel %vm70, %v243, 0.0
    %v257 = vadd.f32 %v255, %v256
    %258 = vadd.xlane.f32.xlu0 %v257
    %v259 = vpop.xlane.xlu0 %258
    %v260 = vsub.f32 0.0, %v251
    %v261 = vsub.f32 0.0, %v259
    %v262 = vmul.f32 %v237, 0.98
    %v263 = vmul.f32 %v243, 0.98
    %v264 = vadd.f32 %v260, %v262
    %v265 = vadd.f32 %v261, %v263
    %268 = vrot.lane.b32.xlu0 %v264, 47
    %v269 = vpop.permute.xlu0 %268
    %270 = vrot.lane.b32.xlu0 %v265, 47
    %v271 = vpop.permute.xlu0 %270
    %vm274 = vcmask 7168
    %275 = vst.msk [vmem:[%s2] sm:$0xff] %vm274, %v269
    %276 = vst.msk [vmem:[%s2 + $0x8] sm:$0xff] %vm274, %v271
    // Predicated region
    $region18: #{tpu_custom_call.1} parent=1 // pred_check
      _
    $region19: #{tpu_custom_call.1} parent=1 // pred_check_branch
      %278 = sbr.rel (0) target = $region21
    $region20: #{tpu_custom_call.1} parent=1 // pred_region
      _
    $region21: #{tpu_custom_call.1} parent=1 // pred_fallthru
      _
    // Predicated region
    $region22: #{tpu_custom_call.1} parent=1 // pred_check
      _
    $region23: #{tpu_custom_call.1} parent=1 // pred_check_branch
      %280 = sbr.rel (0) target = $region25
    $region24: #{tpu_custom_call.1} parent=1 // pred_region
      _
    $region25: #{tpu_custom_call.1} parent=1 // pred_fallthru
      _
    %281 = vsyncpa [#allocation3], 1
    %282 = vsyncpa [#allocation5], 1

</llo_original>
